<compile_context>
chip_gen: v5e
topology: v5e:2x2
jax: 0.10.0
libtpu: 0.0.40
codegen_flags: <defaults>
</compile_context>

<pallas_src>
import jax
import jax.numpy as jnp
import numpy as np
from jax.experimental import pallas as pl
from jax.experimental.pallas import tpu as pltpu

_LANE = 128


def _frera_kernel(m_ref, x_ref, o_ref):
    # m_ref: (T, T)   bf16, resident VMEM (fused irfft o scale o rfft matrix)
    # x_ref: (T, TN)  bf16, one lane-dense tile of the (T, B*C) input slab
    # o_ref: (T, TN)  f32
    o_ref[...] = jnp.dot(m_ref[...], x_ref[...],
                         preferred_element_type=jnp.float32)


def _gate_coef(weight):
    """Eval-mode per-frequency scaling coefficient, shape (F,), float32."""
    # TODO(synk): training-mode concrete/Gumbel sampling (torch.rand based) is
    # not reproduced; deterministic eval-mode (sigmoid) semantics only.
    para0 = jax.nn.sigmoid(weight[:, 0])
    noise = -weight
    thresh = jnp.maximum(0.0, jnp.mean(noise[:, 0]))
    noise = jnp.where(noise < thresh, 0.0, noise)
    n0 = noise[:, 0]
    nz_cnt = jnp.sum((n0 != 0.0).astype(jnp.float32))
    # Guard: if every entry fell below the threshold PyTorch would give NaN
    # (mean of an empty selection); clamp the mean to 1 instead.
    nz_mean = jnp.where(nz_cnt > 0.0,
                        jnp.sum(n0) / jnp.maximum(nz_cnt, 1.0), 1.0)
    return para0 + n0 / nz_mean


def _fused_dft_matrix(weight, T):
    """(T, T) real matrix M with  M @ x == irfft(coef * rfft(x, axis=0), n=T)."""
    F = T // 2 + 1
    coef = _gate_coef(weight)                                   # (F,)
    t = jnp.arange(T, dtype=jnp.float32)
    f = jnp.arange(F, dtype=jnp.float32)
    theta = 2.0 * jnp.pi * f[:, None] * t[None, :] / T          # (F, T)
    # Hermitian fold weights: DC (and Nyquist when T is even) count once.
    fold = jnp.where((f == 0) | (f == T / 2.0), 1.0, 2.0)       # (F,)
    c = (fold * coef) / T                                       # (F,)
    cosm = jnp.cos(theta)                                       # (F, T)
    sinm = jnp.sin(theta)                                       # (F, T)
    # M[t, s] = sum_f c_f * cos(2*pi*f*(t - s)/T)
    return (cosm.T * c[None, :]) @ cosm + (sinm.T * c[None, :]) @ sinm


def frera_forward(x, weight, temperature=0.1, *, n_tile=256):
    """FreRA eval-mode forward.  x: (B, T, C) float32, weight: (T//2+1, 2)."""
    del temperature  # only used by training-mode sampling (not reproduced)
    B, T, C = x.shape
    F = T // 2 + 1
    assert weight.shape == (F, 2)

    # Weight-only work: gate coefficients folded into the (T, T) DFT matrix.
    M = _fused_dft_matrix(weight.astype(jnp.float32), T).astype(jnp.bfloat16)
    # TODO(synk): for very large T (>= ~2048 on v7x's 64 MiB VMEM) the (T, T)
    # matrix should additionally be K-tiled with an f32 accumulator.

    # Lane-dense layout: fold batch and channels into the matmul N dimension,
    # always padded to a 128 multiple so stores are full-lane (no vst.msk).
    N = B * C
    n_needed = ((N + _LANE - 1) // _LANE) * _LANE          # N rounded to 128
    tn = max(_LANE, (n_tile // _LANE) * _LANE)             # lane-aligned tile
    tn = min(tn, n_needed)
    n_pad = ((n_needed + tn - 1) // tn) * tn

    x2 = jnp.transpose(x, (1, 0, 2)).reshape(T, N).astype(jnp.bfloat16)
    if n_pad != N:
        x2 = jnp.pad(x2, ((0, 0), (0, n_pad - N)))

    grid_n = n_pad // tn
    flops = 2 * T * T * n_pad
    out2 = pl.pallas_call(
        _frera_kernel,
        out_shape=jax.ShapeDtypeStruct((T, n_pad), jnp.float32),
        grid=(grid_n,),
        in_specs=[
            # Fused DFT matrix: whole-array resident VMEM operand (constant
            # across the grid -> no per-step DMA, no double buffering).
            pl.BlockSpec(memory_space=pltpu.MemorySpace.VMEM),
            pl.BlockSpec((T, tn), lambda j: (0, j)),
        ],
        out_specs=pl.BlockSpec((T, tn), lambda j: (0, j)),
        compiler_params=pltpu.CompilerParams(
            dimension_semantics=("parallel",)),
        cost_estimate=pl.CostEstimate(
            flops=flops,
            transcendentals=0,
            bytes_accessed=2 * T * T + 2 * T * n_pad + 4 * T * n_pad),
    )(M, x2)

    out2 = out2[:, :N]
    return jnp.transpose(out2.reshape(T, B, C), (1, 0, 2))


def frera_reference(x, weight):
    """Pure-JAX reference mirroring the PyTorch forward (eval mode)."""
    coef = _gate_coef(weight.astype(jnp.float32))
    x_ft = jnp.fft.rfft(x.astype(jnp.float32), axis=-2)
    x_ft = x_ft * coef[:, None]
    return jnp.fft.irfft(x_ft, n=x.shape[-2], axis=-2).astype(jnp.float32)


if __name__ == "__main__":
    key = jax.random.PRNGKey(0)
    k_w, k_x, k_x2 = jax.random.split(key, 3)

    # Shapes that exercise the lane-dense tiled path:
    # len_sw (FFT axis) T=32, C=16 channels, batch B=16 -> N = B*C = 256,
    # i.e. two 128-wide grid steps with n_tile=128.
    B, T, C = 16, 32, 16
    F = T // 2 + 1

    # Same init as torch.nn.init.normal_(weight, 0.0, 0.1).
    weight = (0.1 * jax.random.normal(k_w, (F, 2))).astype(jnp.float32)
    x = jax.random.normal(k_x, (B, T, C), dtype=jnp.float32)

    out = frera_forward(x, weight, n_tile=128)
    out = jax.block_until_ready(out)
    ref = frera_reference(x, weight)
    # bf16 MXU inputs (f32 accumulation): tolerance loosened vs. pure f32.
    np.testing.assert_allclose(np.asarray(out), np.asarray(ref),
                               rtol=5e-2, atol=5e-2)

    # Second case: N = B*C = 40 (not a lane multiple) -> exercises the
    # pad-to-128 path with a single grid step.
    B2, C2 = 2, 20
    x_b = jax.random.normal(k_x2, (B2, T, C2), dtype=jnp.float32)
    out_b = jax.block_until_ready(frera_forward(x_b, weight))
    ref_b = frera_reference(x_b, weight)
    np.testing.assert_allclose(np.asarray(out_b), np.asarray(ref_b),
                               rtol=5e-2, atol=5e-2)

    print("KERNEL_OK")
</pallas_src>

<mosaic_0001>
module attributes {stable_mosaic.version = 11 : i64} {
  func.func @_frera_kernel(%arg0: i32, %arg1: memref<32x32xbf16, #tpu.memory_space<vmem>>, %arg2: memref<32x128xbf16, #tpu.memory_space<vmem>>, %arg3: memref<32x128xf32, #tpu.memory_space<vmem>>) attributes {dimension_semantics = [#tpu.dimension_semantics<parallel>], iteration_bounds = array<i64: 2>, scalar_prefetch = 0 : i64, scratch_operands = 0 : i64, tpu.core_type = #tpu.core_type<tc>, window_params = [{pipeline_mode = #tpu.pipeline_mode<synchronous>, transform_indices = @transform_0, window_bounds = array<i64: 32, 32>}, {transform_indices = @transform_1, window_bounds = array<i64: 32, 128>}, {transform_indices = @transform_2, window_bounds = array<i64: 32, 128>}]} {
    %c0 = arith.constant 0 : index
    %c0_0 = arith.constant 0 : index
    %0 = vector.load %arg1[%c0, %c0_0] : memref<32x32xbf16, #tpu.memory_space<vmem>>, vector<32x32xbf16>
    %c0_1 = arith.constant 0 : index
    %c0_2 = arith.constant 0 : index
    %1 = vector.load %arg2[%c0_1, %c0_2] : memref<32x128xbf16, #tpu.memory_space<vmem>>, vector<32x128xbf16>
    %cst = arith.constant dense<0.000000e+00> : vector<32x128xf32>
    %2 = tpu.matmul %0, %1, %cst {dimension_numbers = #tpu.dot_dimension_numbers<[1], [0], [0], [1], [0, 0, 1, 1], [], []>} : vector<32x32xbf16>, vector<32x128xbf16>, vector<32x128xf32> -> vector<32x128xf32>
    %c0_3 = arith.constant 0 : index
    %c0_4 = arith.constant 0 : index
    %3 = vector.load %arg3[%c0_3, %c0_4] : memref<32x128xf32, #tpu.memory_space<vmem>>, vector<32x128xf32>
    tpu.vector_store %arg3[%c0_3, %c0_4], %2 {strides = array<i32>} : memref<32x128xf32, #tpu.memory_space<vmem>>, vector<32x128xf32>,
    return
  }
  func.func @transform_0(%arg0: i32) -> (i32, i32) {
    %c0_i32 = arith.constant 0 : i32
    %c0_i32_0 = arith.constant 0 : i32
    %c0_i32_1 = arith.constant 0 : i32
    return %c0_i32, %c0_i32_0 : i32, i32
  }
  func.func @transform_1(%arg0: i32) -> (i32, i32) {
    %c0_i32 = arith.constant 0 : i32
    %c0_i32_0 = arith.constant 0 : i32
    return %c0_i32, %arg0 : i32, i32
  }
  func.func @transform_2(%arg0: i32) -> (i32, i32) {
    %c0_i32 = arith.constant 0 : i32
    %c0_i32_0 = arith.constant 0 : i32
    return %c0_i32, %arg0 : i32, i32
  }
}

</mosaic_0001>

<llo_original>
// kernel: tpu_custom_call.1
$region0: #{tpu_custom_call.1}
  #allocation0 [shape = 'u32[]', space=smem, size = 0x4, offset = 0x4, fixed_abs, tag = 'smem constant byte address 0x4 - core index']
  #allocation1 [shape = 'u32[72,128]{1,0:T(1,128)}', space=vmem, size = 0x9000, scoped, tag = 'internal scratch']
  %s0 = inlined_call_operand.hbm [shape: bf16[32,32], index: 0, kind: input, shape index: {}]
  %s1 = inlined_call_operand.hbm [shape: bf16[32,256], index: 1, kind: input, shape index: {}]
  %s2 = inlined_call_operand.hbm [shape: f32[32,256], index: 2, kind: output, shape index: {}]
  %s3 = sld [smem:[#allocation0]]
  $region49: #{tpu_custom_call.1} parent=0
    _
  %s5 = ssub.s32 1, %s3
  %s6 = scalar_select 0, %s5, %s3
  $region1: #{tpu_custom_call.1} parent=0
    #allocation2 [shape = 'u8[8192]{0}', space=vmem, size = 0x2000, scoped, tag = 'input window, operand 0, single buffered']
    #allocation3 [shape = 's32[2]{0}', space=sflag, size = 0x8, scoped, tag = 'scoped memory for tpu_custom_call.1']
    #allocation4 [shape = 's32[2]{0}', space=sflag, size = 0x8, scoped, tag = 'scoped memory for tpu_custom_call.1']
    #allocation5 [shape = 'u8[16384]{0}', space=vmem, size = 0x4000, scoped, tag = 'input window, operand 1']
    #allocation6 [shape = 's32[2]{0}', space=sflag, size = 0x8, scoped, tag = 'scoped memory for tpu_custom_call.1']
    #allocation7 [shape = 'u8[32768]{0}', space=vmem, size = 0x8000, scoped, tag = 'output window, operand 0']
    %7 = vsyncpa [#allocation3], 0
    %8 = vsyncpa [#allocation6], 0
    %s9 = scalar_lea.sflag [#allocation6], 1
    %10 = vsyncpa %s9, 0
    %11 = vsyncpa [#allocation4], 0
    %s12 = scalar_lea.sflag [#allocation4], 1
    %13 = vsyncpa %s12, 0
    loop: start=0, step=1, limit=4
    $region2: #{tpu_custom_call.1} parent=1 // loop_pre_header
      _
    $region3: #{tpu_custom_call.1} parent=1 // loop_header
      %s15 = sphi 0, %s19
      %p16 = scmp.ge.s32.totalorder %s15, 4
      %s23 = sphi 0, %s23
      %s25 = sphi 0, %s23
      %s26 = sphi 0, %s25
      %s40 = sphi 0, %s26
      %s46 = sphi 0, %s48
      %s49 = sphi 0, %s46
      %s50 = sphi 0, %s49
      %s66 = sphi 0, %s50
      %s72 = sphi 0, %s74
      %s75 = sphi 0, %s72
      %s76 = sphi 0, %s75
      %s92 = sphi 0, %s76
    $region4: #{tpu_custom_call.1} parent=1 // loop_header_branch
      %18 = sbr.rel (%p16) target = $region8
    $region5: #{tpu_custom_call.1} parent=1 // loop_body
      %s20 = ssub.s32 %s15, 1
      %s21 = ssub.s32 %s15, 2
      %s22 = sadd.s32 %s15, 1
      %s24 = sadd.s32 %s23, 1
      %p27 = scmp.eq.s32.totalorder %s15, 1
      %p28 = scmp.ne.s32.totalorder %s23, %s25
      %p29 = scmp.eq.s32.totalorder %s15, 0
      %p30 = por %p28, %p29
      %p31 = scmp.ne.s32.totalorder %s23, %s25
      %p32 = scmp.eq.s32.totalorder %s20, 1
      %p33 = por %p31, %p32
      %p34 = scmp.ne.s32.totalorder %s25, %s26
      %p35 = scmp.eq.s32.totalorder %s20, 0
      %p36 = por %p34, %p35
      %p37 = scmp.ne.s32.totalorder %s25, %s26
      %p38 = scmp.eq.s32.totalorder %s21, 1
      %p39 = por %p37, %p38
      %p41 = scmp.ne.s32.totalorder %s26, %s40
      %p42 = scmp.eq.s32.totalorder %s21, 0
      %p43 = por %p41, %p42
      %s44 = ssub.s32 %s15, %s22
      %p45 = scmp.eq.s32.totalorder %s44, 0
      %s47 = sadd.s32 %s46, 1
      %s48 = scalar_select %p45, %s46, %s47
      %p51 = pneg %p45
      %p52 = scmp.eq.s32.totalorder %s15, 1
      %p53 = por %p51, %p52
      %p54 = scmp.ne.s32.totalorder %s46, %s49
      %p55 = scmp.eq.s32.totalorder %s15, 0
      %p56 = por %p54, %p55
      %p57 = scmp.ne.s32.totalorder %s46, %s49
      %p58 = scmp.eq.s32.totalorder %s20, 1
      %p59 = por %p57, %p58
      %p60 = scmp.ne.s32.totalorder %s49, %s50
      %p61 = scmp.eq.s32.totalorder %s20, 0
      %p62 = por %p60, %p61
      %p63 = scmp.ne.s32.totalorder %s49, %s50
      %p64 = scmp.eq.s32.totalorder %s21, 1
      %p65 = por %p63, %p64
      %p67 = scmp.ne.s32.totalorder %s50, %s66
      %p68 = scmp.eq.s32.totalorder %s21, 0
      %p69 = por %p67, %p68
      %s70 = ssub.s32 %s15, %s22
      %p71 = scmp.eq.s32.totalorder %s70, 0
      %s73 = sadd.s32 %s72, 1
      %s74 = scalar_select %p71, %s72, %s73
      %p77 = pneg %p71
      %p78 = scmp.eq.s32.totalorder %s15, 1
      %p79 = por %p77, %p78
      %p80 = scmp.ne.s32.totalorder %s72, %s75
      %p81 = scmp.eq.s32.totalorder %s15, 0
      %p82 = por %p80, %p81
      %p83 = scmp.ne.s32.totalorder %s72, %s75
      %p84 = scmp.eq.s32.totalorder %s20, 1
      %p85 = por %p83, %p84
      %p86 = scmp.ne.s32.totalorder %s75, %s76
      %p87 = scmp.eq.s32.totalorder %s20, 0
      %p88 = por %p86, %p87
      %p89 = scmp.ne.s32.totalorder %s75, %s76
      %p90 = scmp.eq.s32.totalorder %s21, 1
      %p91 = por %p89, %p90
      %p93 = scmp.ne.s32.totalorder %s76, %s92
      %p94 = scmp.eq.s32.totalorder %s21, 0
      %p95 = por %p93, %p94
      %p96 = scmp.le.s32.totalorder 1, %s15
      %p97 = scmp.lt.s32.totalorder %s15, 3
      %p98 = pnand %p96, %p97
      %p99 = pneg %p98
      // Predicated region
      $region9: #{tpu_custom_call.1} parent=5 // pred_check
        _
      $region10: #{tpu_custom_call.1} parent=5 // pred_check_branch
        %101 = sbr.rel (%p98) target = $region12
      $region11: #{tpu_custom_call.1} parent=5 // pred_region
        %s102 = ssub.s32 %s15, 1
        // Predicated region
        $region13: #{tpu_custom_call.1} parent=11 // pred_check
          %p103 = pneg %p36
        $region14: #{tpu_custom_call.1} parent=11 // pred_check_branch
          %105 = sbr.rel (%p103) target = $region16
        $region15: #{tpu_custom_call.1} parent=11 // pred_region
          %107 = vsyncadd [#allocation3], 0
          %s108 = sshll.u32 %s0, 4
          %s109 = int_to_ptr.hbm [resolvable:$true] %s108
          %s110 = sshll.u32 [#allocation2], 4
          %s111 = int_to_ptr.vmem [resolvable:$true] %s110
          %116 = dma.hbm_to_vmem [thread:$0]  %s109, 256, %s111, [#allocation3], 64, 64, 4
        $region16: #{tpu_custom_call.1} parent=11 // pred_fallthru
          _
      $region12: #{tpu_custom_call.1} parent=5 // pred_fallthru
        _
      %p117 = scmp.lt.s32.totalorder %s15, 2
      // Predicated region
      $region17: #{tpu_custom_call.1} parent=5 // pred_check
        %p118 = pneg %p117
      $region18: #{tpu_custom_call.1} parent=5 // pred_check_branch
        %120 = sbr.rel (%p118) target = $region20
      $region19: #{tpu_custom_call.1} parent=5 // pred_region
        // Predicated region
        $region21: #{tpu_custom_call.1} parent=19 // pred_check
          %p121 = pneg %p56
        $region22: #{tpu_custom_call.1} parent=19 // pred_check_branch
          %123 = sbr.rel (%p121) target = $region24
        $region23: #{tpu_custom_call.1} parent=19 // pred_region
          %s124 = sand.u32 %s46, 1
          %s125 = scalar_lea.sflag [#allocation6], %s124
          %s126 = sand.u32 %s46, 1
          %s127 = smul.addr %s126, 16
          %s128 = scalar_lea.vmem [#allocation5], %s127
          %130 = vsyncadd %s125, 0
          %s131 = smul.addr %s15, 4
          %s132 = scalar_lea.hbm %s1, %s131
          %s133 = sshll.u32 %s132, 4
          %s134 = int_to_ptr.hbm [resolvable:$true] %s133
          %s135 = sshll.u32 %s128, 4
          %s136 = int_to_ptr.vmem [resolvable:$true] %s135
          %141 = dma.hbm_to_vmem [thread:$0]  %s134, 256, %s136, %s125, 128, 64, 4
        $region24: #{tpu_custom_call.1} parent=19 // pred_fallthru
          _
      $region20: #{tpu_custom_call.1} parent=5 // pred_fallthru
        _
      %p142 = scmp.le.s32.totalorder 1, %s15
      %p143 = scmp.lt.s32.totalorder %s15, 3
      %p144 = pnand %p142, %p143
      %p145 = pneg %p144
      // Predicated region
      $region25: #{tpu_custom_call.1} parent=5 // pred_check
        _
      $region26: #{tpu_custom_call.1} parent=5 // pred_check_branch
        %147 = sbr.rel (%p144) target = $region28
      $region27: #{tpu_custom_call.1} parent=5 // pred_region
        %s148 = ssub.s32 %s15, 1
        // Predicated region
        $region29: #{tpu_custom_call.1} parent=27 // pred_check
          %p149 = pneg %p36
        $region30: #{tpu_custom_call.1} parent=27 // pred_check_branch
          %151 = sbr.rel (%p149) target = $region32
        $region31: #{tpu_custom_call.1} parent=27 // pred_region
          %153 = dma.done [#allocation3], 256
        $region32: #{tpu_custom_call.1} parent=27 // pred_fallthru
          _
        %s154 = sand.u32 %s49, 1
        %s155 = scalar_lea.sflag [#allocation6], %s154
        %s156 = sand.u32 %s49, 1
        %s157 = smul.addr %s156, 16
        %s158 = scalar_lea.vmem [#allocation5], %s157
        // Predicated region
        $region33: #{tpu_custom_call.1} parent=27 // pred_check
          %p159 = pneg %p62
        $region34: #{tpu_custom_call.1} parent=27 // pred_check_branch
          %161 = sbr.rel (%p159) target = $region36
        $region35: #{tpu_custom_call.1} parent=27 // pred_region
          %163 = dma.done %s155, 256
        $region36: #{tpu_custom_call.1} parent=27 // pred_fallthru
          _
        %p164 = pneg %p36
        %p165 = pneg %p33
        %s166 = sand.u32 %s49, 1
        %s167 = scalar_lea.sflag [#allocation6], %s166
        %s168 = sand.u32 %s49, 1
        %s169 = smul.addr %s168, 16
        %s170 = scalar_lea.vmem [#allocation5], %s169
        %p171 = pneg %p62
        %p172 = pneg %p59
        %p173 = pneg %p88
        %p174 = pneg %p85
        %s175 = sand.u32 %s75, 1
        %s176 = scalar_lea.sflag [#allocation4], %s175
        %s177 = sand.u32 %s75, 1
        %s178 = smul.addr %s177, 32
        %s179 = scalar_lea.vmem [#allocation7], %s178
        %v181 = vld [vmem:[#allocation2] sm:$0xf]
        %v182 = vld [vmem:[#allocation2 + $0x4] sm:$0xf]
        %v183 = vld [vmem:[#allocation2 + $0x8] sm:$0xf]
        %v184 = vld [vmem:[#allocation2 + $0xc] sm:$0xf]
        %v185 = vld [vmem:[%s158] sm:$0xf]
        %v186 = vld [vmem:[%s158 + $0x4] sm:$0xf]
        %v187 = vld [vmem:[%s158 + $0x8] sm:$0xf]
        %v188 = vld [vmem:[%s158 + $0xc] sm:$0xf]
        %v193 = vunpack.c.l.b16 %v181
        %v194 = vunpack.c.l.b16 %v182
        %v195 = vunpack.c.l.b16 %v183
        %v196 = vunpack.c.l.b16 %v184
        %v197 = vpack.c.b16 %v194, %v193
        %v198 = vpack.c.b16 %v196, %v195
        %v203 = vunpack.c.l.b16 %v185
        %v204 = vunpack.c.l.b16 %v186
        %v205 = vunpack.c.l.b16 %v187
        %v206 = vunpack.c.l.b16 %v188
        %v207 = vpack.c.b16 %v204, %v203
        %v208 = vpack.c.b16 %v206, %v205
        %vm211 = vcmask 261120
        %v213 = vsel %vm211, %v197, 0
        %v216 = vsel %vm211, %v198, 0
        %218 = vmatpush.bf16.msra.mxu0 0
        %219 = vmatpush.bf16.msra.mxu0 0
        %220 = vmatpush.bf16.msra.mxu0 0
        %221 = vmatpush.bf16.msra.mxu0 0
        %222 = vmatpush.bf16.msra.mxu0 0
        %223 = vmatpush.bf16.msra.mxu0 0
        %224 = vmatpush.bf16.msra.mxu0 %v208
        %225 = vmatpush.bf16.msra.mxu0 %v207
        %226 = vmatmul.bf16.gmra.mxu0 %v213
        %v227 = vpop.f32.mrf.mxu0
        %v228 = vadd.f32 0.0, %v227
        %v229 = vpop.f32.mrf.mxu0
        %v230 = vadd.f32 0.0, %v229
        %231 = vmatmul.bf16.gmra.mxu0 %v216
        %v232 = vpop.f32.mrf.mxu0
        %v233 = vadd.f32 0.0, %v232
        %v234 = vpop.f32.mrf.mxu0
        %v235 = vadd.f32 0.0, %v234
        %236 = vdwg.mxu0
        %237 = vst [vmem:[%s179] sm:$0xff] %v228
        %238 = vst [vmem:[%s179 + $0x8] sm:$0xff] %v230
        %239 = vst [vmem:[%s179 + $0x10] sm:$0xff] %v233
        %240 = vst [vmem:[%s179 + $0x18] sm:$0xff] %v235
        %s241 = sand.u32 %s75, 1
        %s242 = scalar_lea.sflag [#allocation4], %s241
        %s243 = sand.u32 %s75, 1
        %s244 = smul.addr %s243, 32
        %s245 = scalar_lea.vmem [#allocation7], %s244
        // Predicated region
        $region37: #{tpu_custom_call.1} parent=27 // pred_check
          %p246 = pneg %p85
        $region38: #{tpu_custom_call.1} parent=27 // pred_check_branch
          %248 = sbr.rel (%p246) target = $region40
        $region39: #{tpu_custom_call.1} parent=27 // pred_region
          %250 = vsyncadd %s242, 0
          %s251 = smul.addr %s20, 8
          %s252 = scalar_lea.hbm %s2, %s251
          %s253 = sshll.u32 %s245, 4
          %s254 = int_to_ptr.vmem [resolvable:$true] %s253
          %s255 = sshll.u32 %s252, 4
          %s256 = int_to_ptr.hbm [resolvable:$true] %s255
          %261 = dma.vmem_to_hbm [thread:$0]  %s254, 512, %s256, %s242, 128, 256, 8
        $region40: #{tpu_custom_call.1} parent=27 // pred_fallthru
          _
      $region28: #{tpu_custom_call.1} parent=5 // pred_fallthru
        _
      %p262 = scmp.le.s32.totalorder 2, %s15
      // Predicated region
      $region41: #{tpu_custom_call.1} parent=5 // pred_check
        %p263 = pneg %p262
      $region42: #{tpu_custom_call.1} parent=5 // pred_check_branch
        %265 = sbr.rel (%p263) target = $region44
      $region43: #{tpu_custom_call.1} parent=5 // pred_region
        %s266 = ssub.s32 %s15, 2
        // Predicated region
        $region45: #{tpu_custom_call.1} parent=43 // pred_check
          %p267 = pneg %p91
        $region46: #{tpu_custom_call.1} parent=43 // pred_check_branch
          %269 = sbr.rel (%p267) target = $region48
        $region47: #{tpu_custom_call.1} parent=43 // pred_region
          %s270 = sand.u32 %s76, 1
          %s271 = scalar_lea.sflag [#allocation4], %s270
          %s272 = sand.u32 %s76, 1
          %s273 = smul.addr %s272, 32
          %s274 = scalar_lea.vmem [#allocation7], %s273
          %276 = dma.done %s271, 512
        $region48: #{tpu_custom_call.1} parent=43 // pred_fallthru
          _
      $region44: #{tpu_custom_call.1} parent=5 // pred_fallthru
        _
    $region6: #{tpu_custom_call.1} parent=1 // loop_footer
      %s19 = sadd.s32 1, %s15
    $region7: #{tpu_custom_call.1} parent=1 // loop_footer_branch
      %14 = sbr.rel target = $region3
    $region8: #{tpu_custom_call.1} parent=1 // loop_exit
      _
    %277 = vsyncpa [#allocation3], 1
    %s278 = scalar_lea.sflag [#allocation3], 1
    %279 = vsyncpa %s278, 1
    %280 = vsyncpa [#allocation6], 1
    %s281 = scalar_lea.sflag [#allocation6], 1
    %282 = vsyncpa %s281, 1
    %283 = vsyncpa [#allocation4], 1
    %s284 = scalar_lea.sflag [#allocation4], 1
    %285 = vsyncpa %s284, 1

</llo_original>
